<compile_context>
chip_gen: v7x
topology: tpu7x:2x2x1
jax: 0.10.0
libtpu: 0.0.40
codegen_flags: <defaults>
</compile_context>

<pallas_src>
import math
import numpy as np
import jax
import jax.numpy as jnp
from jax.experimental import pallas as pl
from jax.experimental.pallas import tpu as pltpu

H = 8            # hidden size
G3 = 3 * H       # gate width (r|z|n) = 24
NLAYERS = 2
PROWS = 16       # 2 f32 sublane tiles
PCOLS = 128      # one full lane tile -> contiguous, aligned parameter DMA

# Packed parameter slab layout (f32[16, 128]):
#   rows 0:8 , cols  0:24  -> weight_hh_l0.T        (whh0)
#   rows 0:8 , cols 24:48  -> weight_hh_l1.T        (whh1)
#   rows 0:8 , cols 48:72  -> weight_ih_l1.T        (wih1)
#   rows 0:8 , col     72  -> linear.weight.T       (wlin)
#   row  8   , cols  0:24  -> weight_ih_l0.T (row)  (wih0)
#   row  9   , cols  0:24  -> bias_ih_l0
#   row 10   , cols  0:48  -> [bias_hh_l0 | bias_hh_l1]
#   row 11   , cols  0:24  -> bias_ih_l1
#   row 12   , col      0  -> linear.bias
#   (remaining lanes/rows are zero padding)


def rnn_gru_kernel(x_ref, h_ref, p_ref, y_ref, hout_ref):
    # scalar input from SMEM (seq=1, batch=1, feat=1)
    x = x_ref[0]                                   # f32 scalar

    h = h_ref[...]                                 # (2, H) stacked layer hiddens

    # static views of the packed parameter slab (single DMA'd VMEM buffer)
    whh_cat = p_ref[0:8, 0:2 * G3]                 # (8, 48)  [whh0 | whh1]
    wih1    = p_ref[0:8, 2 * G3:3 * G3]            # (8, 24)
    wlin    = p_ref[0:8, 3 * G3:3 * G3 + 1]        # (8, 1)
    wih0    = p_ref[8:9, 0:G3]                     # (1, 24)
    bih0    = p_ref[9:10, 0:G3]                    # (1, 24)
    bhh_cat = p_ref[10:11, 0:2 * G3]               # (1, 48)  [bhh0 | bhh1]
    bih1    = p_ref[11:12, 0:G3]                   # (1, 24)
    blin    = p_ref[12:13, 0:1]                    # (1, 1)

    # One fused MXU push for BOTH hidden-hidden matmuls:
    #   row 0, cols  0:24 -> h0 @ whh0 + bhh0
    #   row 1, cols 24:48 -> h1 @ whh1 + bhh1
    gh = jnp.dot(h, whh_cat, preferred_element_type=jnp.float32) + bhh_cat
    gh0 = gh[0:1, 0:G3]
    gh1 = gh[1:2, G3:2 * G3]

    def gru_gates(gi, ghl, hprev):
        # single sigmoid pass over the (r|z) lanes, tanh only on the n lanes
        rz = jax.nn.sigmoid(gi[:, 0:2 * H] + ghl[:, 0:2 * H])   # (1, 2H)
        r = rz[:, 0:H]
        z = rz[:, H:2 * H]
        n = jnp.tanh(gi[:, 2 * H:3 * H] + r * ghl[:, 2 * H:3 * H])
        return (1.0 - z) * n + z * hprev

    # --- layer 0: input feature dim is 1 -> ih "matmul" is a scalar broadcast (VPU)
    gi0 = x * wih0 + bih0                                        # (1, 24)
    h0n = gru_gates(gi0, gh0, h[0:1, :])                         # (1, H)

    # --- layer 1
    gi1 = jnp.dot(h0n, wih1, preferred_element_type=jnp.float32) + bih1
    h1n = gru_gates(gi1, gh1, h[1:2, :])                         # (1, H)

    # --- final linear (flattened GRU output has exactly H elements here)
    y_ref[...] = jnp.dot(h1n, wlin, preferred_element_type=jnp.float32) + blin

    # single store for both hidden rows
    hout_ref[...] = jnp.concatenate([h0n, h1n], axis=0)


def make_params(key):
    """Deterministic init matching PyTorch's default U(-1/sqrt(H), 1/sqrt(H))."""
    ks = jax.random.split(key, 11)
    bound = 1.0 / math.sqrt(H)

    def u(k, shape):
        return jax.random.uniform(k, shape, jnp.float32, minval=-bound, maxval=bound)

    params = dict(
        wih0=u(ks[0], (1, G3)),       # weight_ih_l0.T
        whh0=u(ks[1], (H, G3)),       # weight_hh_l0.T
        bih0=u(ks[2], (1, G3)),
        bhh0=u(ks[3], (1, G3)),
        wih1=u(ks[4], (H, G3)),       # weight_ih_l1.T
        whh1=u(ks[5], (H, G3)),       # weight_hh_l1.T
        bih1=u(ks[6], (1, G3)),
        bhh1=u(ks[7], (1, G3)),
        wlin=u(ks[8], (H, 1)),        # linear.weight.T
        blin=u(ks[9], (1, 1)),
    )
    hidden_state = jax.random.normal(ks[10], (NLAYERS, 1, H), jnp.float32)
    return params, hidden_state


def pack_params(p):
    """Pack all weights/biases into one contiguous, lane-aligned f32[16, 128] slab."""
    P = jnp.zeros((PROWS, PCOLS), jnp.float32)
    P = P.at[0:8, 0:G3].set(p["whh0"])
    P = P.at[0:8, G3:2 * G3].set(p["whh1"])
    P = P.at[0:8, 2 * G3:3 * G3].set(p["wih1"])
    P = P.at[0:8, 3 * G3:3 * G3 + 1].set(p["wlin"])
    P = P.at[8, 0:G3].set(p["wih0"][0])
    P = P.at[9, 0:G3].set(p["bih0"][0])
    P = P.at[10, 0:G3].set(p["bhh0"][0])
    P = P.at[10, G3:2 * G3].set(p["bhh1"][0])
    P = P.at[11, 0:G3].set(p["bih1"][0])
    P = P.at[12, 0].set(p["blin"][0, 0])
    return P


@jax.jit
def rnn_gru_forward(x, hidden_state, packed):
    """x: (1, 1, 1); hidden_state: (2, 1, H); packed: (16, 128).
    Returns (y: (1,), h_new: (2, 1, H))."""
    x_s = x.reshape(1)                       # scalar, goes to SMEM
    h2 = hidden_state.reshape(NLAYERS, H)
    smem = pl.BlockSpec(memory_space=pltpu.MemorySpace.SMEM)
    vmem = pl.BlockSpec(memory_space=pltpu.MemorySpace.VMEM)
    y, h_new = pl.pallas_call(
        rnn_gru_kernel,
        out_shape=(jax.ShapeDtypeStruct((1, 1), jnp.float32),
                   jax.ShapeDtypeStruct((NLAYERS, H), jnp.float32)),
        in_specs=[smem, vmem, vmem],
        out_specs=(vmem, vmem),
        input_output_aliases={1: 1},         # hidden-state in -> hidden-state out
    )(x_s, h2, packed)
    return y.reshape(1), h_new.reshape(NLAYERS, 1, H)


def reference_forward(x, hidden_state, p):
    """Plain numpy reference with PyTorch GRU semantics."""
    def sigmoid(v):
        return 1.0 / (1.0 + np.exp(-v))

    def cell(inp, h, wih, whh, bih, bhh):
        gi = inp @ wih + bih
        gh = h @ whh + bhh
        r = sigmoid(gi[:, :H] + gh[:, :H])
        z = sigmoid(gi[:, H:2 * H] + gh[:, H:2 * H])
        n = np.tanh(gi[:, 2 * H:] + r * gh[:, 2 * H:])
        return (1.0 - z) * n + z * h

    xt = x.reshape(1, 1)
    h0 = hidden_state[0].reshape(1, H)
    h1 = hidden_state[1].reshape(1, H)
    h0n = cell(xt, h0, p["wih0"], p["whh0"], p["bih0"], p["bhh0"])
    h1n = cell(h0n, h1, p["wih1"], p["whh1"], p["bih1"], p["bhh1"])
    y = h1n @ p["wlin"] + p["blin"]
    hn = np.stack([h0n, h1n], axis=0).reshape(NLAYERS, 1, H)
    return y.reshape(1), hn


if __name__ == "__main__":
    key = jax.random.PRNGKey(0)
    kx, kp = jax.random.split(key)
    params, hidden_state = make_params(kp)
    packed = pack_params(params)
    # x: (seq_len=1, batch=1, input_size=1) — the only shape the reference
    # forward (view(-1) + Linear(8,1)) is consistent with.
    x = jax.random.normal(kx, (1, 1, 1), jnp.float32)

    y, h_new = rnn_gru_forward(x, hidden_state, packed)
    jax.block_until_ready((y, h_new))

    y_ref, h_ref = reference_forward(
        np.asarray(x), np.asarray(hidden_state),
        {k: np.asarray(v) for k, v in params.items()})
    assert np.allclose(np.asarray(y), y_ref, atol=1e-5), "output mismatch"
    assert np.allclose(np.asarray(h_new), h_ref, atol=1e-5), "hidden mismatch"

    print("KERNEL_OK")
</pallas_src>

<mosaic_0001>
module attributes {stable_mosaic.version = 11 : i64} {
  func.func @rnn_gru_kernel(%arg0: memref<1xf32, #tpu.memory_space<smem>>, %arg1: memref<2x8xf32, #tpu.memory_space<vmem>>, %arg2: memref<16x128xf32, #tpu.memory_space<vmem>>, %arg3: memref<1x1xf32, #tpu.memory_space<vmem>>, %arg4: memref<2x8xf32, #tpu.memory_space<vmem>>) attributes {dimension_semantics = [], scalar_prefetch = 0 : i64, scratch_operands = 0 : i64, tpu.core_type = #tpu.core_type<tc>} {
    %c0 = arith.constant 0 : index
    %0 = memref.load %arg0[%c0] : memref<1xf32, #tpu.memory_space<smem>>
    %c0_0 = arith.constant 0 : index
    %c0_1 = arith.constant 0 : index
    %1 = vector.load %arg1[%c0_0, %c0_1] : memref<2x8xf32, #tpu.memory_space<vmem>>, vector<2x8xf32>
    %c0_2 = arith.constant 0 : index
    %c0_3 = arith.constant 0 : index
    %2 = vector.load %arg2[%c0_2, %c0_3] : memref<16x128xf32, #tpu.memory_space<vmem>>, vector<8x48xf32>
    %c0_4 = arith.constant 0 : index
    %c48 = arith.constant 48 : index
    %3 = vector.load %arg2[%c0_4, %c48] : memref<16x128xf32, #tpu.memory_space<vmem>>, vector<8x24xf32>
    %c0_5 = arith.constant 0 : index
    %c72 = arith.constant 72 : index
    %4 = vector.load %arg2[%c0_5, %c72] : memref<16x128xf32, #tpu.memory_space<vmem>>, vector<8x1xf32>
    %c8 = arith.constant 8 : index
    %c0_6 = arith.constant 0 : index
    %5 = vector.load %arg2[%c8, %c0_6] : memref<16x128xf32, #tpu.memory_space<vmem>>, vector<1x24xf32>
    %c9 = arith.constant 9 : index
    %c0_7 = arith.constant 0 : index
    %6 = vector.load %arg2[%c9, %c0_7] : memref<16x128xf32, #tpu.memory_space<vmem>>, vector<1x24xf32>
    %c10 = arith.constant 10 : index
    %c0_8 = arith.constant 0 : index
    %7 = vector.load %arg2[%c10, %c0_8] : memref<16x128xf32, #tpu.memory_space<vmem>>, vector<1x48xf32>
    %c11 = arith.constant 11 : index
    %c0_9 = arith.constant 0 : index
    %8 = vector.load %arg2[%c11, %c0_9] : memref<16x128xf32, #tpu.memory_space<vmem>>, vector<1x24xf32>
    %c12 = arith.constant 12 : index
    %c0_10 = arith.constant 0 : index
    %9 = vector.load %arg2[%c12, %c0_10] : memref<16x128xf32, #tpu.memory_space<vmem>>, vector<1x1xf32>
    %cst = arith.constant dense<0.000000e+00> : vector<2x48xf32>
    %10 = tpu.matmul %1, %2, %cst {dimension_numbers = #tpu.dot_dimension_numbers<[1], [0], [0], [1], [0, 0, 1, 1], [], []>} : vector<2x8xf32>, vector<8x48xf32>, vector<2x48xf32> -> vector<2x48xf32>
    %11 = vector.broadcast %7 : vector<1x48xf32> to vector<2x48xf32>
    %12 = arith.addf %10, %11 : vector<2x48xf32>
    %13 = vector.extract_strided_slice %12 {offsets = [0, 0], sizes = [1, 24], strides = [1, 1]} : vector<2x48xf32> to vector<1x24xf32>
    %14 = vector.extract_strided_slice %12 {offsets = [1, 24], sizes = [1, 24], strides = [1, 1]} : vector<2x48xf32> to vector<1x24xf32>
    %15 = vector.broadcast %0 : f32 to vector<1x24xf32>
    %16 = arith.mulf %15, %5 : vector<1x24xf32>
    %17 = arith.addf %16, %6 : vector<1x24xf32>
    %18 = vector.extract_strided_slice %1 {offsets = [0, 0], sizes = [1, 8], strides = [1, 1]} : vector<2x8xf32> to vector<1x8xf32>
    %19 = vector.extract_strided_slice %17 {offsets = [0, 0], sizes = [1, 16], strides = [1, 1]} : vector<1x24xf32> to vector<1x16xf32>
    %20 = vector.extract_strided_slice %13 {offsets = [0, 0], sizes = [1, 16], strides = [1, 1]} : vector<1x24xf32> to vector<1x16xf32>
    %21 = arith.addf %19, %20 : vector<1x16xf32>
    %22 = arith.negf %21 : vector<1x16xf32>
    %23 = math.exp %22 : vector<1x16xf32>
    %cst_11 = arith.constant 1.000000e+00 : f32
    %24 = vector.broadcast %cst_11 : f32 to vector<1x16xf32>
    %25 = arith.addf %24, %23 : vector<1x16xf32>
    %26 = arith.divf %24, %25 : vector<1x16xf32>
    %27 = vector.extract_strided_slice %26 {offsets = [0, 0], sizes = [1, 8], strides = [1, 1]} : vector<1x16xf32> to vector<1x8xf32>
    %28 = vector.extract_strided_slice %26 {offsets = [0, 8], sizes = [1, 8], strides = [1, 1]} : vector<1x16xf32> to vector<1x8xf32>
    %29 = vector.extract_strided_slice %17 {offsets = [0, 16], sizes = [1, 8], strides = [1, 1]} : vector<1x24xf32> to vector<1x8xf32>
    %30 = vector.extract_strided_slice %13 {offsets = [0, 16], sizes = [1, 8], strides = [1, 1]} : vector<1x24xf32> to vector<1x8xf32>
    %31 = arith.mulf %27, %30 : vector<1x8xf32>
    %32 = arith.addf %29, %31 : vector<1x8xf32>
    %33 = math.tanh %32 : vector<1x8xf32>
    %cst_12 = arith.constant 1.000000e+00 : f32
    %34 = vector.broadcast %cst_12 : f32 to vector<1x8xf32>
    %35 = arith.subf %34, %28 : vector<1x8xf32>
    %36 = arith.mulf %35, %33 : vector<1x8xf32>
    %37 = arith.mulf %28, %18 : vector<1x8xf32>
    %38 = arith.addf %36, %37 : vector<1x8xf32>
    %cst_13 = arith.constant dense<0.000000e+00> : vector<1x24xf32>
    %39 = tpu.matmul %38, %3, %cst_13 {dimension_numbers = #tpu.dot_dimension_numbers<[1], [0], [0], [1], [0, 0, 1, 1], [], []>} : vector<1x8xf32>, vector<8x24xf32>, vector<1x24xf32> -> vector<1x24xf32>
    %40 = arith.addf %39, %8 : vector<1x24xf32>
    %41 = vector.extract_strided_slice %1 {offsets = [1, 0], sizes = [1, 8], strides = [1, 1]} : vector<2x8xf32> to vector<1x8xf32>
    %42 = vector.extract_strided_slice %40 {offsets = [0, 0], sizes = [1, 16], strides = [1, 1]} : vector<1x24xf32> to vector<1x16xf32>
    %43 = vector.extract_strided_slice %14 {offsets = [0, 0], sizes = [1, 16], strides = [1, 1]} : vector<1x24xf32> to vector<1x16xf32>
    %44 = arith.addf %42, %43 : vector<1x16xf32>
    %45 = arith.negf %44 : vector<1x16xf32>
    %46 = math.exp %45 : vector<1x16xf32>
    %cst_14 = arith.constant 1.000000e+00 : f32
    %47 = vector.broadcast %cst_14 : f32 to vector<1x16xf32>
    %48 = arith.addf %47, %46 : vector<1x16xf32>
    %49 = arith.divf %47, %48 : vector<1x16xf32>
    %50 = vector.extract_strided_slice %49 {offsets = [0, 0], sizes = [1, 8], strides = [1, 1]} : vector<1x16xf32> to vector<1x8xf32>
    %51 = vector.extract_strided_slice %49 {offsets = [0, 8], sizes = [1, 8], strides = [1, 1]} : vector<1x16xf32> to vector<1x8xf32>
    %52 = vector.extract_strided_slice %40 {offsets = [0, 16], sizes = [1, 8], strides = [1, 1]} : vector<1x24xf32> to vector<1x8xf32>
    %53 = vector.extract_strided_slice %14 {offsets = [0, 16], sizes = [1, 8], strides = [1, 1]} : vector<1x24xf32> to vector<1x8xf32>
    %54 = arith.mulf %50, %53 : vector<1x8xf32>
    %55 = arith.addf %52, %54 : vector<1x8xf32>
    %56 = math.tanh %55 : vector<1x8xf32>
    %cst_15 = arith.constant 1.000000e+00 : f32
    %57 = vector.broadcast %cst_15 : f32 to vector<1x8xf32>
    %58 = arith.subf %57, %51 : vector<1x8xf32>
    %59 = arith.mulf %58, %56 : vector<1x8xf32>
    %60 = arith.mulf %51, %41 : vector<1x8xf32>
    %61 = arith.addf %59, %60 : vector<1x8xf32>
    %cst_16 = arith.constant dense<0.000000e+00> : vector<1x1xf32>
    %62 = tpu.matmul %61, %4, %cst_16 {dimension_numbers = #tpu.dot_dimension_numbers<[1], [0], [0], [1], [0, 0, 1, 1], [], []>} : vector<1x8xf32>, vector<8x1xf32>, vector<1x1xf32> -> vector<1x1xf32>
    %63 = arith.addf %62, %9 : vector<1x1xf32>
    %c0_17 = arith.constant 0 : index
    %c0_18 = arith.constant 0 : index
    %64 = vector.load %arg3[%c0_17, %c0_18] : memref<1x1xf32, #tpu.memory_space<vmem>>, vector<1x1xf32>
    tpu.vector_store %arg3[%c0_17, %c0_18], %63 {strides = array<i32>} : memref<1x1xf32, #tpu.memory_space<vmem>>, vector<1x1xf32>,
    %65 = tpu.concatenate %38, %61 in 0 : vector<1x8xf32>, vector<1x8xf32> -> vector<2x8xf32>
    %c0_19 = arith.constant 0 : index
    %c0_20 = arith.constant 0 : index
    %66 = vector.load %arg4[%c0_19, %c0_20] : memref<2x8xf32, #tpu.memory_space<vmem>>, vector<2x8xf32>
    tpu.vector_store %arg4[%c0_19, %c0_20], %65 {strides = array<i32>} : memref<2x8xf32, #tpu.memory_space<vmem>>, vector<2x8xf32>,
    return
  }
}

</mosaic_0001>

<llo_original>
// kernel: rnn_gru_forward.1
$region0: #{rnn_gru_forward.1}
  #allocation0 [shape = 'u32[]', space=smem, size = 0x4, offset = 0x4, fixed_abs, tag = 'smem constant byte address 0x4 - core index']
  #allocation1 [shape = 'u32[144,128]{1,0:T(1,128)}', space=vmem, size = 0x12000, scoped, tag = 'internal scratch']
  #allocation2 [shape = 'f32[1]{0:T(128)S(6)}', space=smem, size = 0x200, scoped, tag = 'scoped memory for rnn_gru_forward.1']
  %s0 = inlined_call_operand.<no memory space> [shape: f32[1], index: 0, kind: input, shape index: {}]
  %s1 = inlined_call_operand.vmem [shape: f32[2,8], index: 1, kind: input, shape index: {}, may-alias: {1,4}]
  %s2 = inlined_call_operand.vmem [shape: f32[16,128], index: 2, kind: input, shape index: {}]
  %s3 = inlined_call_operand.hbm [shape: f32[1,1], index: 3, kind: output, shape index: {0}]
  %s4 = inlined_call_operand.vmem [shape: f32[2,8], index: 4, kind: output, shape index: {1}, may-alias: {1,4}]
  %5 = xla_tuple %s3, %s4
  %s6 = sld [smem:[#allocation0]]
  $region30: #{rnn_gru_forward.1} parent=0
    _
  %s8 = ssub.s32 1, %s6
  %s9 = scalar_select 0, %s8, %s6
  %10 = sst [smem:[#allocation2]] %s0
  $region1: #{rnn_gru_forward.1} parent=0
    #allocation3 [shape = 'u8[512]{0}', space=vmem, size = 0x400, scoped, tag = 'output window, operand 0, single buffered']
    #allocation4 [shape = 's32[1]{0}', space=sflag, size = 0x4, scoped, tag = 'scoped memory for rnn_gru_forward.1']
    %11 = vsyncpa [#allocation4], 0
    // Predicated region
    $region2: #{rnn_gru_forward.1} parent=1 // pred_check
      _
    $region3: #{rnn_gru_forward.1} parent=1 // pred_check_branch
      %13 = sbr.rel (0) target = $region5
    $region4: #{rnn_gru_forward.1} parent=1 // pred_region
      _
    $region5: #{rnn_gru_forward.1} parent=1 // pred_fallthru
      _
    // Predicated region
    $region6: #{rnn_gru_forward.1} parent=1 // pred_check
      _
    $region7: #{rnn_gru_forward.1} parent=1 // pred_check_branch
      %15 = sbr.rel (0) target = $region9
    $region8: #{rnn_gru_forward.1} parent=1 // pred_region
      _
    $region9: #{rnn_gru_forward.1} parent=1 // pred_fallthru
      _
    // Predicated region
    $region10: #{rnn_gru_forward.1} parent=1 // pred_check
      _
    $region11: #{rnn_gru_forward.1} parent=1 // pred_check_branch
      %17 = sbr.rel (0) target = $region13
    $region12: #{rnn_gru_forward.1} parent=1 // pred_region
      _
    $region13: #{rnn_gru_forward.1} parent=1 // pred_fallthru
      _
    %s18 = sld [smem:[#allocation2]]
    %v19 = vld [vmem:[%s1] sm:$0x3]
    %v20 = vld [vmem:[%s2] sm:$0xff]
    %v21 = vld [vmem:[%s2 + $0x8] sm:$0x1]
    %v22 = vld [vmem:[%s2 + $0x9] sm:$0x1]
    %v23 = vld [vmem:[%s2 + $0xa] sm:$0x1]
    %v24 = vld [vmem:[%s2 + $0xb] sm:$0x1]
    %v25 = vld [vmem:[%s2 + $0xc] sm:$0x1]
    %v26 = vlaneseq
    %v27 = vshrl.u32 %v26, 7
    %v28 = vsub.s32 0, %v27
    %v29 = vrot.slane %v23, %v28
    %vm30 = vcmask 64512
    %v32 = vsel %vm30, %v19, 0
    %34 = vmatprep.subr.mxu0 0.0
    %35 = vmatpush1.msra.mxu0 %v20
    %36 = vmatprep.subr.mxu0 0.0
    %37 = vmatpush1.msra.mxu0 0.0
    %38 = vmatprep.subr.mxu0 0.0
    %39 = vmatpush1.msra.mxu0 0.0
    %40 = vmatprep.subr.mxu0 0.0
    %41 = vmatpush1.msra.mxu0 0.0
    %42 = vmatprep.subr.mxu0 0.0
    %43 = vmatpush1.msra.mxu0 0.0
    %44 = vmatprep.subr.mxu0 0.0
    %45 = vmatpush1.msra.mxu0 0.0
    %46 = vmatprep.subr.mxu0 0.0
    %47 = vmatpush1.msra.mxu0 0.0
    %48 = vmatprep.subr.mxu0 0.0
    %49 = vmatpush1.msra.mxu0 0.0
    %50 = vmatprep.subr.mxu0 0.0
    %51 = vmatpush1.msra.mxu0 0.0
    %52 = vmatprep.subr.mxu0 0.0
    %53 = vmatpush1.msra.mxu0 0.0
    %54 = vmatprep.subr.mxu0 0.0
    %55 = vmatpush1.msra.mxu0 0.0
    %56 = vmatprep.subr.mxu0 0.0
    %57 = vmatpush1.msra.mxu0 0.0
    %58 = vmatprep.subr.mxu0 0.0
    %59 = vmatpush1.msra.mxu0 0.0
    %60 = vmatprep.subr.mxu0 0.0
    %61 = vmatpush1.msra.mxu0 0.0
    %62 = vmatprep.subr.mxu0 0.0
    %63 = vmatpush1.msra.mxu0 0.0
    %64 = vmatprep.subr.mxu0 0.0
    %65 = vmatpush1.msra.mxu0 0.0
    %66 = vmatprep.subr.mxu0 0.0
    %67 = vmatpush1.msra.mxu0 0.0
    %68 = vmatprep.subr.mxu0 0.0
    %69 = vmatpush1.msra.mxu0 0.0
    %70 = vmatprep.subr.mxu0 0.0
    %71 = vmatpush1.msra.mxu0 0.0
    %72 = vmatprep.subr.mxu0 0.0
    %73 = vmatpush1.msra.mxu0 0.0
    %74 = vmatprep.subr.mxu0 0.0
    %75 = vmatpush1.msra.mxu0 0.0
    %76 = vmatprep.subr.mxu0 0.0
    %77 = vmatpush1.msra.mxu0 0.0
    %78 = vmatprep.subr.mxu0 0.0
    %79 = vmatpush1.msra.mxu0 0.0
    %80 = vmatprep.subr.mxu0 0.0
    %81 = vmatpush1.msra.mxu0 0.0
    %82 = vmatprep.subr.mxu0 0.0
    %83 = vmatpush1.msra.mxu0 0.0
    %84 = vmatprep.subr.mxu0 0.0
    %85 = vmatpush1.msra.mxu0 0.0
    %86 = vmatprep.subr.mxu0 0.0
    %87 = vmatpush1.msra.mxu0 0.0
    %88 = vmatprep.subr.mxu0 0.0
    %89 = vmatpush1.msra.mxu0 0.0
    %90 = vmatprep.subr.mxu0 0.0
    %91 = vmatpush1.msra.mxu0 0.0
    %92 = vmatprep.subr.mxu0 0.0
    %93 = vmatpush1.msra.mxu0 0.0
    %94 = vmatprep.subr.mxu0 0.0
    %95 = vmatpush1.msra.mxu0 0.0
    %96 = vmatprep.subr.mxu0 0.0
    %97 = vmatpush1.msra.mxu0 0.0
    %98 = vmatprep.mubr.f32.mxu0 0.0
    %99 = vmatmul.mubr.f32.gmra.mrb[0].mxu0 %v32
    %v100 = vpop.f32.mrb[0].mxu0
    %v101 = vadd.f32 %v29, %v100
    %v102 = vpop.f32.mrb[0].mxu0
    %103 = vdwg.mxu0
    %v104 = vstv %s18
    %v105 = vmul.f32 %v104, %v21
    %v106 = vadd.f32 %v105, %v22
    %v107 = vadd.f32 %v106, %v101
    %v108 = vxor.u32 %v107, 2147483648
    %v109 = vmul.f32 %v108, 1.442695
    %v110 = vpow.pop %v109
    %v111 = vadd.f32 %v110, 1.0
    %v112 = vrcp.pop %v111
    %v113 = vmul.f32 1.0, %v112
    %115 = vrot.lane.b32.xlu0 %v101, 112
    %v116 = vpop.permute.xlu0 %115
    %v118 = vmul.f32 %v113, %v116
    %120 = vrot.lane.b32.xlu0 %v118, 16
    %v121 = vpop.permute.xlu0 %120
    %v123 = vadd.f32 %v106, %v121
    %v124 = vtanh.pop %v123
    %v125 = vsub.f32 1.0, %v113
    %127 = vrot.lane.b32.xlu0 %v124, 120
    %v128 = vpop.permute.xlu0 %127
    %v130 = vmul.f32 %v125, %v128
    %131 = vrot.lane.b32.xlu0 %v19, 8
    %v132 = vpop.permute.xlu0 %131
    %v134 = vmul.f32 %v113, %v132
    %v135 = vadd.f32 %v130, %v134
    %137 = vrot.lane.b32.xlu0 %v135, 120
    %v138 = vpop.permute.xlu0 %137
    %140 = vrot.lane.b32.xlu0 %v20, 80
    %v141 = vpop.permute.xlu0 %140
    %v143 = vsel %vm30, %v138, 0
    %145 = vmatprep.subr.mxu0 0.0
    %146 = vmatpush1.msra.mxu0 %v141
    %147 = vmatprep.subr.mxu0 0.0
    %148 = vmatpush1.msra.mxu0 0.0
    %149 = vmatprep.subr.mxu0 0.0
    %150 = vmatpush1.msra.mxu0 0.0
    %151 = vmatprep.subr.mxu0 0.0
    %152 = vmatpush1.msra.mxu0 0.0
    %153 = vmatprep.subr.mxu0 0.0
    %154 = vmatpush1.msra.mxu0 0.0
    %155 = vmatprep.subr.mxu0 0.0
    %156 = vmatpush1.msra.mxu0 0.0
    %157 = vmatprep.subr.mxu0 0.0
    %158 = vmatpush1.msra.mxu0 0.0
    %159 = vmatprep.subr.mxu0 0.0
    %160 = vmatpush1.msra.mxu0 0.0
    %161 = vmatprep.subr.mxu0 0.0
    %162 = vmatpush1.msra.mxu0 0.0
    %163 = vmatprep.subr.mxu0 0.0
    %164 = vmatpush1.msra.mxu0 0.0
    %165 = vmatprep.subr.mxu0 0.0
    %166 = vmatpush1.msra.mxu0 0.0
    %167 = vmatprep.subr.mxu0 0.0
    %168 = vmatpush1.msra.mxu0 0.0
    %169 = vmatprep.subr.mxu0 0.0
    %170 = vmatpush1.msra.mxu0 0.0
    %171 = vmatprep.subr.mxu0 0.0
    %172 = vmatpush1.msra.mxu0 0.0
    %173 = vmatprep.subr.mxu0 0.0
    %174 = vmatpush1.msra.mxu0 0.0
    %175 = vmatprep.subr.mxu0 0.0
    %176 = vmatpush1.msra.mxu0 0.0
    %177 = vmatprep.subr.mxu0 0.0
    %178 = vmatpush1.msra.mxu0 0.0
    %179 = vmatprep.subr.mxu0 0.0
    %180 = vmatpush1.msra.mxu0 0.0
    %181 = vmatprep.subr.mxu0 0.0
    %182 = vmatpush1.msra.mxu0 0.0
    %183 = vmatprep.subr.mxu0 0.0
    %184 = vmatpush1.msra.mxu0 0.0
    %185 = vmatprep.subr.mxu0 0.0
    %186 = vmatpush1.msra.mxu0 0.0
    %187 = vmatprep.subr.mxu0 0.0
    %188 = vmatpush1.msra.mxu0 0.0
    %189 = vmatprep.subr.mxu0 0.0
    %190 = vmatpush1.msra.mxu0 0.0
    %191 = vmatprep.subr.mxu0 0.0
    %192 = vmatpush1.msra.mxu0 0.0
    %193 = vmatprep.subr.mxu0 0.0
    %194 = vmatpush1.msra.mxu0 0.0
    %195 = vmatprep.subr.mxu0 0.0
    %196 = vmatpush1.msra.mxu0 0.0
    %197 = vmatprep.subr.mxu0 0.0
    %198 = vmatpush1.msra.mxu0 0.0
    %199 = vmatprep.subr.mxu0 0.0
    %200 = vmatpush1.msra.mxu0 0.0
    %201 = vmatprep.subr.mxu0 0.0
    %202 = vmatpush1.msra.mxu0 0.0
    %203 = vmatprep.subr.mxu0 0.0
    %204 = vmatpush1.msra.mxu0 0.0
    %205 = vmatprep.subr.mxu0 0.0
    %206 = vmatpush1.msra.mxu0 0.0
    %207 = vmatprep.subr.mxu0 0.0
    %208 = vmatpush1.msra.mxu0 0.0
    %209 = vmatprep.mubr.f32.mxu0 0.0
    %210 = vmatmul.mubr.f32.gmra.mrb[0].mxu0 %v143
    %v211 = vpop.f32.mrb[0].mxu0
    %v212 = vadd.f32 %v24, %v211
    %v213 = vpop.f32.mrb[0].mxu0
    %214 = vdwg.mxu0
    %v215 = vrot.slane %v101, 1
    %216 = vrot.lane.b32.xlu0 %v215, 104
    %v217 = vpop.permute.xlu0 %216
    %v219 = vadd.f32 %v212, %v217
    %v220 = vxor.u32 %v219, 2147483648
    %v221 = vmul.f32 %v220, 1.442695
    %v222 = vpow.pop %v221
    %v223 = vadd.f32 %v222, 1.0
    %v224 = vrcp.pop %v223
    %v225 = vmul.f32 1.0, %v224
    %226 = vrot.lane.b32.xlu0 %v215, 88
    %v227 = vpop.permute.xlu0 %226
    %v229 = vmul.f32 %v225, %v227
    %231 = vrot.lane.b32.xlu0 %v229, 16
    %v232 = vpop.permute.xlu0 %231
    %v234 = vadd.f32 %v212, %v232
    %v235 = vtanh.pop %v234
    %v236 = vsub.f32 1.0, %v225
    %238 = vrot.lane.b32.xlu0 %v235, 120
    %v239 = vpop.permute.xlu0 %238
    %v241 = vmul.f32 %v236, %v239
    %v242 = vrot.slane %v19, 1
    %243 = vrot.lane.b32.xlu0 %v242, 8
    %v244 = vpop.permute.xlu0 %243
    %v246 = vmul.f32 %v225, %v244
    %v247 = vadd.f32 %v241, %v246
    %249 = vrot.lane.b32.xlu0 %v247, 120
    %v250 = vpop.permute.xlu0 %249
    %251 = vrot.lane.b32.xlu0 %v20, 56
    %v252 = vpop.permute.xlu0 %251
    %v254 = vsel %vm30, %v250, 0
    %256 = vmatprep.subr.mxu0 0.0
    %257 = vmatpush1.msra.mxu0 %v252
    %258 = vmatprep.subr.mxu0 0.0
    %259 = vmatpush1.msra.mxu0 0.0
    %260 = vmatprep.subr.mxu0 0.0
    %261 = vmatpush1.msra.mxu0 0.0
    %262 = vmatprep.subr.mxu0 0.0
    %263 = vmatpush1.msra.mxu0 0.0
    %264 = vmatprep.subr.mxu0 0.0
    %265 = vmatpush1.msra.mxu0 0.0
    %266 = vmatprep.subr.mxu0 0.0
    %267 = vmatpush1.msra.mxu0 0.0
    %268 = vmatprep.subr.mxu0 0.0
    %269 = vmatpush1.msra.mxu0 0.0
    %270 = vmatprep.subr.mxu0 0.0
    %271 = vmatpush1.msra.mxu0 0.0
    %272 = vmatprep.subr.mxu0 0.0
    %273 = vmatpush1.msra.mxu0 0.0
    %274 = vmatprep.subr.mxu0 0.0
    %275 = vmatpush1.msra.mxu0 0.0
    %276 = vmatprep.subr.mxu0 0.0
    %277 = vmatpush1.msra.mxu0 0.0
    %278 = vmatprep.subr.mxu0 0.0
    %279 = vmatpush1.msra.mxu0 0.0
    %280 = vmatprep.subr.mxu0 0.0
    %281 = vmatpush1.msra.mxu0 0.0
    %282 = vmatprep.subr.mxu0 0.0
    %283 = vmatpush1.msra.mxu0 0.0
    %284 = vmatprep.subr.mxu0 0.0
    %285 = vmatpush1.msra.mxu0 0.0
    %286 = vmatprep.subr.mxu0 0.0
    %287 = vmatpush1.msra.mxu0 0.0
    %288 = vmatprep.subr.mxu0 0.0
    %289 = vmatpush1.msra.mxu0 0.0
    %290 = vmatprep.subr.mxu0 0.0
    %291 = vmatpush1.msra.mxu0 0.0
    %292 = vmatprep.subr.mxu0 0.0
    %293 = vmatpush1.msra.mxu0 0.0
    %294 = vmatprep.subr.mxu0 0.0
    %295 = vmatpush1.msra.mxu0 0.0
    %296 = vmatprep.subr.mxu0 0.0
    %297 = vmatpush1.msra.mxu0 0.0
    %298 = vmatprep.subr.mxu0 0.0
    %299 = vmatpush1.msra.mxu0 0.0
    %300 = vmatprep.subr.mxu0 0.0
    %301 = vmatpush1.msra.mxu0 0.0
    %302 = vmatprep.subr.mxu0 0.0
    %303 = vmatpush1.msra.mxu0 0.0
    %304 = vmatprep.subr.mxu0 0.0
    %305 = vmatpush1.msra.mxu0 0.0
    %306 = vmatprep.subr.mxu0 0.0
    %307 = vmatpush1.msra.mxu0 0.0
    %308 = vmatprep.subr.mxu0 0.0
    %309 = vmatpush1.msra.mxu0 0.0
    %310 = vmatprep.subr.mxu0 0.0
    %311 = vmatpush1.msra.mxu0 0.0
    %312 = vmatprep.subr.mxu0 0.0
    %313 = vmatpush1.msra.mxu0 0.0
    %314 = vmatprep.subr.mxu0 0.0
    %315 = vmatpush1.msra.mxu0 0.0
    %316 = vmatprep.subr.mxu0 0.0
    %317 = vmatpush1.msra.mxu0 0.0
    %318 = vmatprep.subr.mxu0 0.0
    %319 = vmatpush1.msra.mxu0 0.0
    %320 = vmatprep.mubr.f32.mxu0 0.0
    %321 = vmatmul.mubr.f32.gmra.mrb[0].mxu0 %v254
    %v322 = vpop.f32.mrb[0].mxu0
    %v323 = vadd.f32 %v25, %v322
    %v324 = vpop.f32.mrb[0].mxu0
    %325 = vdwg.mxu0
    %vm326 = vcmask 0
    %327 = vst.msk [vmem:[#allocation3] sm:$0x1] %vm326, %v323
    %v328 = vrot.slane %v247, 7
    %vm330 = vcmask 1040384
    %v331 = vsel %vm330, %v135, %v328
    %333 = vrot.lane.b32.xlu0 %v331, 120
    %v334 = vpop.permute.xlu0 %333
    %vm336 = vcmask 58368
    %337 = vst.msk [vmem:[%s4] sm:$0x3] %vm336, %v334
    // Predicated region
    $region14: #{rnn_gru_forward.1} parent=1 // pred_check
      _
    $region15: #{rnn_gru_forward.1} parent=1 // pred_check_branch
      %339 = sbr.rel (0) target = $region17
    $region16: #{rnn_gru_forward.1} parent=1 // pred_region
      %s341 = ssub.s32 16, 16
      %342 = vsyncadd [#allocation4], %s341
      %s344 = sshll.u32 [#allocation3], 4
      %s345 = int_to_ptr.vmem [resolvable:$true] %s344
      %347 = dma.vmem_to_hbm [thread:$0]  %s345, 16, %s3, [#allocation4]
    $region17: #{rnn_gru_forward.1} parent=1 // pred_fallthru
      _
    // Predicated region
    $region18: #{rnn_gru_forward.1} parent=1 // pred_check
      _
    $region19: #{rnn_gru_forward.1} parent=1 // pred_check_branch
      %349 = sbr.rel (0) target = $region21
    $region20: #{rnn_gru_forward.1} parent=1 // pred_region
      _
    $region21: #{rnn_gru_forward.1} parent=1 // pred_fallthru
      _
    // Predicated region
    $region22: #{rnn_gru_forward.1} parent=1 // pred_check
      _
    $region23: #{rnn_gru_forward.1} parent=1 // pred_check_branch
      %351 = sbr.rel (0) target = $region25
    $region24: #{rnn_gru_forward.1} parent=1 // pred_region
      %352 = dma.done [#allocation4], 16
    $region25: #{rnn_gru_forward.1} parent=1 // pred_fallthru
      _
    // Predicated region
    $region26: #{rnn_gru_forward.1} parent=1 // pred_check
      _
    $region27: #{rnn_gru_forward.1} parent=1 // pred_check_branch
      %354 = sbr.rel (0) target = $region29
    $region28: #{rnn_gru_forward.1} parent=1 // pred_region
      _
    $region29: #{rnn_gru_forward.1} parent=1 // pred_fallthru
      _
    %355 = vsyncpa [#allocation4], 1

</llo_original>
